<compile_context>
chip_gen: v5e
topology: v5e:2x2
jax: 0.10.0
libtpu: 0.0.40
codegen_flags: <defaults>
</compile_context>

<pallas_src>
import math
from functools import partial

import jax
import jax.numpy as jnp
from jax.experimental import pallas as pl
from jax.experimental.pallas import tpu as pltpu

_BN_EPS = 1e-5
_LANE = 128
_SUBLANE = 8
_TILE_B_PREF = 256   # fills v6e/v7x 256x256 MXU; two passes on v5e's 128x128


def _round_up(n: int, m: int) -> int:
    return (n + m - 1) // m * m


def _vmem_cap_bytes() -> int:
    """~78% of this generation's physical VMEM (headroom for compiler scratch)."""
    try:
        phys = int(pltpu.get_tpu_info().vmem_capacity_bytes)
    except Exception:
        phys = 64 * 1024 * 1024          # conservative fallback (v7x per-core)
    return max(int(phys * 0.78), 32 * 1024 * 1024)


def generate_geometric_series(min_n: int, max_n: int, reverse: bool = False):
    series = [int(2.0 ** i) for i in range(int(min_n), int(max_n) + 1)]
    if reverse:
        series.reverse()
    return series


# ---------------------------------------------------------------------------
# Fused Pallas kernel: the whole geometric step-down stack in one body.
# Per layer:  relu(x @ W + b)  ->  relu(y * bn_scale + bn_shift)
# (eval-mode Dropout is identity; its ReLU is a no-op on an already-ReLU'd tensor)
# ---------------------------------------------------------------------------
def _make_fused_kernel(num_layers: int):
    def kernel(*refs):
        x_ref = refs[0]
        o_ref = refs[-1]
        layer_refs = refs[1:-1]                  # 2 refs per layer: (w bf16, vec f32)
        y = x_ref[...]                           # (TILE_B, D_pad) f32, stays on-chip
        for l in range(num_layers):              # statically unrolled
            w_ref = layer_refs[2 * l + 0]        # (D_in_pad, D_out_pad) bf16
            v_ref = layer_refs[2 * l + 1]        # (8, D_out_pad) f32: rows b/scale/shift
            vec = v_ref[...]
            b, sc, sh = vec[0:1, :], vec[1:2, :], vec[2:3, :]
            y = jnp.dot(y.astype(jnp.bfloat16), w_ref[...],
                        preferred_element_type=jnp.float32)       # MXU, f32 accumulate
            y = jnp.maximum(y + b, 0.0)                           # relu(Linear); Dropout eval = id
            y = jnp.maximum(y * sc + sh, 0.0)                     # relu(BatchNorm, folded)
        o_ref[...] = y.astype(o_ref.dtype)
    return kernel


# ---------------------------------------------------------------------------
# Parameter construction (mirrors the nn.Module __init__ shapes)
# ---------------------------------------------------------------------------
def init_geometric_step_down(key, input_dim: int, min_n: int = 5):
    max_n = math.floor(math.log2(input_dim))
    series = generate_geometric_series(int(min_n), max_n, reverse=True)
    params = []
    d_in = input_dim
    for units in series:
        key, kw, kb, kg, kbe, km, kv = jax.random.split(key, 7)
        bound = 1.0 / math.sqrt(d_in)
        w = jax.random.uniform(kw, (units, d_in), jnp.float32, -bound, bound)
        b = jax.random.uniform(kb, (units,), jnp.float32, -bound, bound)
        gamma = jax.random.uniform(kg, (units,), jnp.float32, 0.5, 1.5)
        beta = jax.random.uniform(kbe, (units,), jnp.float32, -0.5, 0.5)
        run_mean = jax.random.uniform(km, (units,), jnp.float32, -0.1, 0.1)
        run_var = jax.random.uniform(kv, (units,), jnp.float32, 0.5, 1.5)
        params.append(dict(w=w, b=b, gamma=gamma, beta=beta,
                           run_mean=run_mean, run_var=run_var))
        d_in = units
    return params


def prepare_params(raw_params, input_dim: int):
    """One-time prep: transpose + bf16-cast weights, fold BN stats, pack row
    vectors into one (8, D_out_pad) array per layer, zero-pad to 128 lanes."""
    prepared = []
    d_in_pad = _round_up(input_dim, _LANE)
    for p in raw_params:
        units, d_in = p["w"].shape
        d_out_pad = _round_up(units, _LANE)
        scale = (p["gamma"] / jnp.sqrt(p["run_var"] + _BN_EPS)).astype(jnp.float32)
        shift = (p["beta"] - p["run_mean"] * scale).astype(jnp.float32)

        w_t = jnp.zeros((d_in_pad, d_out_pad), jnp.bfloat16)
        w_t = w_t.at[:d_in, :units].set(p["w"].T.astype(jnp.bfloat16))

        vec = jnp.zeros((_SUBLANE, d_out_pad), jnp.float32)   # one DMA per layer
        vec = vec.at[0, :units].set(p["b"].astype(jnp.float32))
        vec = vec.at[1, :units].set(scale)
        vec = vec.at[2, :units].set(shift)

        prepared.append(dict(w_t=w_t, vec=vec))
        d_in_pad = d_out_pad
    out_dim = int(raw_params[-1]["w"].shape[0])
    return prepared, out_dim


# ---------------------------------------------------------------------------
# Forward: one pallas_call for the whole stack, batch-tiled "parallel" grid
# ---------------------------------------------------------------------------
@partial(jax.jit, static_argnames=("out_dim",))
def geometric_step_down_forward(prepared, x, *, out_dim):
    B, d_in = x.shape
    num_layers = len(prepared)
    d_in_pad = prepared[0]["w_t"].shape[0]
    d_out_pad = prepared[-1]["w_t"].shape[1]

    # Batch tiling: single tile for small batches, 256-row tiles otherwise so the
    # parallel grid axis both fills the MXU and shards across v7x's two cores.
    b_pad_min = _round_up(max(B, _SUBLANE), _SUBLANE)
    if b_pad_min <= _TILE_B_PREF:
        tile_b = b_pad_min
        B_pad = b_pad_min
    else:
        tile_b = _TILE_B_PREF
        B_pad = _round_up(B, tile_b)
    num_b_tiles = B_pad // tile_b

    # Skip the pad/copy entirely when the input is already aligned.
    if B_pad == B and d_in_pad == d_in:
        x_pad = x.astype(jnp.float32)
    else:
        x_pad = jnp.zeros((B_pad, d_in_pad), jnp.float32)
        x_pad = x_pad.at[:B, :d_in].set(x.astype(jnp.float32))

    in_specs = [pl.BlockSpec((tile_b, d_in_pad), lambda i: (i, 0))]
    args = [x_pad]
    # resident-VMEM estimate: 2x double-buffer on every block + activation slack
    resident = 2 * tile_b * (d_in_pad + d_out_pad) * 4
    for p in prepared:
        di, do = p["w_t"].shape
        in_specs.append(pl.BlockSpec((di, do), lambda i: (0, 0)))        # weight: resident
        in_specs.append(pl.BlockSpec((_SUBLANE, do), lambda i: (0, 0)))  # b/scale/shift pack
        args += [p["w_t"], p["vec"]]
        resident += 2 * (di * do * 2 + _SUBLANE * do * 4)
        resident += 2 * tile_b * do * 4          # in-kernel activations (f32 + bf16 copies)

    vmem_limit = int(min(max(int(resident * 1.5), 32 * 1024 * 1024), _vmem_cap_bytes()))

    out_pad = pl.pallas_call(
        _make_fused_kernel(num_layers),
        out_shape=jax.ShapeDtypeStruct((B_pad, d_out_pad), jnp.float32),
        grid=(num_b_tiles,),
        in_specs=in_specs,
        out_specs=pl.BlockSpec((tile_b, d_out_pad), lambda i: (i, 0)),
        compiler_params=pltpu.CompilerParams(
            dimension_semantics=("parallel",),
            vmem_limit_bytes=vmem_limit),
    )(*args)
    # NOTE: padded batch rows of out_pad hold relu(bias)-derived garbage; they are
    # sliced off here and must never be consumed directly.
    return out_pad[:B, :out_dim]


def _reference_forward(params, x):
    """Pure-jnp f32 reference (eval-mode PyTorch semantics) for verification."""
    x = x.astype(jnp.float32)
    for p in params:
        y = x @ p["w"].T + p["b"]
        y = jnp.maximum(y, 0.0)                        # relu(Linear)
        y = jnp.maximum(y, 0.0)                        # relu(Dropout eval)
        y = (y - p["run_mean"]) / jnp.sqrt(p["run_var"] + _BN_EPS)
        y = y * p["gamma"] + p["beta"]
        x = jnp.maximum(y, 0.0)                        # relu(BatchNorm)
    return x


if __name__ == "__main__":
    INPUT_DIM = 128   # -> geometric series [128, 64, 32] for min_n=5
    BATCH = 8

    key = jax.random.PRNGKey(0)
    key, kx = jax.random.split(key)
    x = jax.random.normal(kx, (BATCH, INPUT_DIM), jnp.float32)

    raw_params = init_geometric_step_down(key, INPUT_DIM, min_n=5)
    prepared, out_dim = prepare_params(raw_params, INPUT_DIM)

    out = geometric_step_down_forward(prepared, x, out_dim=out_dim)
    out = jax.block_until_ready(out)

    ref = _reference_forward(raw_params, x)
    assert out.shape == (BATCH, out_dim), out.shape
    # bf16 weights/activations (f32 accumulate) vs pure-f32 reference -> loose tol.
    assert jnp.allclose(out, ref, atol=5e-2, rtol=5e-2), "mismatch vs reference"
    assert bool(jnp.all(out >= 0.0)), "ReLU output must be non-negative"

    print("KERNEL_OK")
</pallas_src>

<mosaic_0001>
module attributes {stable_mosaic.version = 11 : i64} {
  func.func @kernel(%arg0: i32, %arg1: memref<8x128xf32, #tpu.memory_space<vmem>>, %arg2: memref<128x128xbf16, #tpu.memory_space<vmem>>, %arg3: memref<8x128xf32, #tpu.memory_space<vmem>>, %arg4: memref<128x128xbf16, #tpu.memory_space<vmem>>, %arg5: memref<8x128xf32, #tpu.memory_space<vmem>>, %arg6: memref<128x128xbf16, #tpu.memory_space<vmem>>, %arg7: memref<8x128xf32, #tpu.memory_space<vmem>>, %arg8: memref<8x128xf32, #tpu.memory_space<vmem>>) attributes {dimension_semantics = [#tpu.dimension_semantics<parallel>], iteration_bounds = array<i64: 1>, scalar_prefetch = 0 : i64, scratch_operands = 0 : i64, tpu.core_type = #tpu.core_type<tc>, window_params = [{transform_indices = @transform_0, window_bounds = array<i64: 8, 128>}, {pipeline_mode = #tpu.pipeline_mode<synchronous>, transform_indices = @transform_1, window_bounds = array<i64: 128, 128>}, {pipeline_mode = #tpu.pipeline_mode<synchronous>, transform_indices = @transform_2, window_bounds = array<i64: 8, 128>}, {pipeline_mode = #tpu.pipeline_mode<synchronous>, transform_indices = @transform_3, window_bounds = array<i64: 128, 128>}, {pipeline_mode = #tpu.pipeline_mode<synchronous>, transform_indices = @transform_4, window_bounds = array<i64: 8, 128>}, {pipeline_mode = #tpu.pipeline_mode<synchronous>, transform_indices = @transform_5, window_bounds = array<i64: 128, 128>}, {pipeline_mode = #tpu.pipeline_mode<synchronous>, transform_indices = @transform_6, window_bounds = array<i64: 8, 128>}, {transform_indices = @transform_7, window_bounds = array<i64: 8, 128>}]} {
    %c0 = arith.constant 0 : index
    %c0_0 = arith.constant 0 : index
    %0 = vector.load %arg1[%c0, %c0_0] : memref<8x128xf32, #tpu.memory_space<vmem>>, vector<8x128xf32>
    %c0_1 = arith.constant 0 : index
    %c0_2 = arith.constant 0 : index
    %1 = vector.load %arg3[%c0_1, %c0_2] : memref<8x128xf32, #tpu.memory_space<vmem>>, vector<8x128xf32>
    %2 = vector.extract_strided_slice %1 {offsets = [0, 0], sizes = [1, 128], strides = [1, 1]} : vector<8x128xf32> to vector<1x128xf32>
    %3 = vector.extract_strided_slice %1 {offsets = [1, 0], sizes = [1, 128], strides = [1, 1]} : vector<8x128xf32> to vector<1x128xf32>
    %4 = vector.extract_strided_slice %1 {offsets = [2, 0], sizes = [1, 128], strides = [1, 1]} : vector<8x128xf32> to vector<1x128xf32>
    %5 = arith.truncf %0 : vector<8x128xf32> to vector<8x128xbf16>
    %c0_3 = arith.constant 0 : index
    %c0_4 = arith.constant 0 : index
    %6 = vector.load %arg2[%c0_3, %c0_4] : memref<128x128xbf16, #tpu.memory_space<vmem>>, vector<128x128xbf16>
    %cst = arith.constant dense<0.000000e+00> : vector<8x128xf32>
    %7 = tpu.matmul %5, %6, %cst {dimension_numbers = #tpu.dot_dimension_numbers<[1], [0], [0], [1], [0, 0, 1, 1], [], []>} : vector<8x128xbf16>, vector<128x128xbf16>, vector<8x128xf32> -> vector<8x128xf32>
    %8 = vector.broadcast %2 : vector<1x128xf32> to vector<8x128xf32>
    %9 = arith.addf %7, %8 : vector<8x128xf32>
    %cst_5 = arith.constant 0.000000e+00 : f32
    %10 = vector.broadcast %cst_5 : f32 to vector<8x128xf32>
    %11 = arith.maximumf %9, %10 : vector<8x128xf32>
    %12 = vector.broadcast %3 : vector<1x128xf32> to vector<8x128xf32>
    %13 = arith.mulf %11, %12 : vector<8x128xf32>
    %14 = vector.broadcast %4 : vector<1x128xf32> to vector<8x128xf32>
    %15 = arith.addf %13, %14 : vector<8x128xf32>
    %cst_6 = arith.constant 0.000000e+00 : f32
    %16 = vector.broadcast %cst_6 : f32 to vector<8x128xf32>
    %17 = arith.maximumf %15, %16 : vector<8x128xf32>
    %c0_7 = arith.constant 0 : index
    %c0_8 = arith.constant 0 : index
    %18 = vector.load %arg5[%c0_7, %c0_8] : memref<8x128xf32, #tpu.memory_space<vmem>>, vector<8x128xf32>
    %19 = vector.extract_strided_slice %18 {offsets = [0, 0], sizes = [1, 128], strides = [1, 1]} : vector<8x128xf32> to vector<1x128xf32>
    %20 = vector.extract_strided_slice %18 {offsets = [1, 0], sizes = [1, 128], strides = [1, 1]} : vector<8x128xf32> to vector<1x128xf32>
    %21 = vector.extract_strided_slice %18 {offsets = [2, 0], sizes = [1, 128], strides = [1, 1]} : vector<8x128xf32> to vector<1x128xf32>
    %22 = arith.truncf %17 : vector<8x128xf32> to vector<8x128xbf16>
    %c0_9 = arith.constant 0 : index
    %c0_10 = arith.constant 0 : index
    %23 = vector.load %arg4[%c0_9, %c0_10] : memref<128x128xbf16, #tpu.memory_space<vmem>>, vector<128x128xbf16>
    %cst_11 = arith.constant dense<0.000000e+00> : vector<8x128xf32>
    %24 = tpu.matmul %22, %23, %cst_11 {dimension_numbers = #tpu.dot_dimension_numbers<[1], [0], [0], [1], [0, 0, 1, 1], [], []>} : vector<8x128xbf16>, vector<128x128xbf16>, vector<8x128xf32> -> vector<8x128xf32>
    %25 = vector.broadcast %19 : vector<1x128xf32> to vector<8x128xf32>
    %26 = arith.addf %24, %25 : vector<8x128xf32>
    %cst_12 = arith.constant 0.000000e+00 : f32
    %27 = vector.broadcast %cst_12 : f32 to vector<8x128xf32>
    %28 = arith.maximumf %26, %27 : vector<8x128xf32>
    %29 = vector.broadcast %20 : vector<1x128xf32> to vector<8x128xf32>
    %30 = arith.mulf %28, %29 : vector<8x128xf32>
    %31 = vector.broadcast %21 : vector<1x128xf32> to vector<8x128xf32>
    %32 = arith.addf %30, %31 : vector<8x128xf32>
    %cst_13 = arith.constant 0.000000e+00 : f32
    %33 = vector.broadcast %cst_13 : f32 to vector<8x128xf32>
    %34 = arith.maximumf %32, %33 : vector<8x128xf32>
    %c0_14 = arith.constant 0 : index
    %c0_15 = arith.constant 0 : index
    %35 = vector.load %arg7[%c0_14, %c0_15] : memref<8x128xf32, #tpu.memory_space<vmem>>, vector<8x128xf32>
    %36 = vector.extract_strided_slice %35 {offsets = [0, 0], sizes = [1, 128], strides = [1, 1]} : vector<8x128xf32> to vector<1x128xf32>
    %37 = vector.extract_strided_slice %35 {offsets = [1, 0], sizes = [1, 128], strides = [1, 1]} : vector<8x128xf32> to vector<1x128xf32>
    %38 = vector.extract_strided_slice %35 {offsets = [2, 0], sizes = [1, 128], strides = [1, 1]} : vector<8x128xf32> to vector<1x128xf32>
    %39 = arith.truncf %34 : vector<8x128xf32> to vector<8x128xbf16>
    %c0_16 = arith.constant 0 : index
    %c0_17 = arith.constant 0 : index
    %40 = vector.load %arg6[%c0_16, %c0_17] : memref<128x128xbf16, #tpu.memory_space<vmem>>, vector<128x128xbf16>
    %cst_18 = arith.constant dense<0.000000e+00> : vector<8x128xf32>
    %41 = tpu.matmul %39, %40, %cst_18 {dimension_numbers = #tpu.dot_dimension_numbers<[1], [0], [0], [1], [0, 0, 1, 1], [], []>} : vector<8x128xbf16>, vector<128x128xbf16>, vector<8x128xf32> -> vector<8x128xf32>
    %42 = vector.broadcast %36 : vector<1x128xf32> to vector<8x128xf32>
    %43 = arith.addf %41, %42 : vector<8x128xf32>
    %cst_19 = arith.constant 0.000000e+00 : f32
    %44 = vector.broadcast %cst_19 : f32 to vector<8x128xf32>
    %45 = arith.maximumf %43, %44 : vector<8x128xf32>
    %46 = vector.broadcast %37 : vector<1x128xf32> to vector<8x128xf32>
    %47 = arith.mulf %45, %46 : vector<8x128xf32>
    %48 = vector.broadcast %38 : vector<1x128xf32> to vector<8x128xf32>
    %49 = arith.addf %47, %48 : vector<8x128xf32>
    %cst_20 = arith.constant 0.000000e+00 : f32
    %50 = vector.broadcast %cst_20 : f32 to vector<8x128xf32>
    %51 = arith.maximumf %49, %50 : vector<8x128xf32>
    %c0_21 = arith.constant 0 : index
    %c0_22 = arith.constant 0 : index
    %52 = vector.load %arg8[%c0_21, %c0_22] : memref<8x128xf32, #tpu.memory_space<vmem>>, vector<8x128xf32>
    tpu.vector_store %arg8[%c0_21, %c0_22], %51 {strides = array<i32>} : memref<8x128xf32, #tpu.memory_space<vmem>>, vector<8x128xf32>,
    return
  }
  func.func @transform_0(%arg0: i32) -> (i32, i32) {
    %c0_i32 = arith.constant 0 : i32
    %c0_i32_0 = arith.constant 0 : i32
    return %arg0, %c0_i32 : i32, i32
  }
  func.func @transform_1(%arg0: i32) -> (i32, i32) {
    %c0_i32 = arith.constant 0 : i32
    %c0_i32_0 = arith.constant 0 : i32
    %c0_i32_1 = arith.constant 0 : i32
    return %c0_i32, %c0_i32_0 : i32, i32
  }
  func.func @transform_2(%arg0: i32) -> (i32, i32) {
    %c0_i32 = arith.constant 0 : i32
    %c0_i32_0 = arith.constant 0 : i32
    %c0_i32_1 = arith.constant 0 : i32
    return %c0_i32, %c0_i32_0 : i32, i32
  }
  func.func @transform_3(%arg0: i32) -> (i32, i32) {
    %c0_i32 = arith.constant 0 : i32
    %c0_i32_0 = arith.constant 0 : i32
    %c0_i32_1 = arith.constant 0 : i32
    return %c0_i32, %c0_i32_0 : i32, i32
  }
  func.func @transform_4(%arg0: i32) -> (i32, i32) {
    %c0_i32 = arith.constant 0 : i32
    %c0_i32_0 = arith.constant 0 : i32
    %c0_i32_1 = arith.constant 0 : i32
    return %c0_i32, %c0_i32_0 : i32, i32
  }
  func.func @transform_5(%arg0: i32) -> (i32, i32) {
    %c0_i32 = arith.constant 0 : i32
    %c0_i32_0 = arith.constant 0 : i32
    %c0_i32_1 = arith.constant 0 : i32
    return %c0_i32, %c0_i32_0 : i32, i32
  }
  func.func @transform_6(%arg0: i32) -> (i32, i32) {
    %c0_i32 = arith.constant 0 : i32
    %c0_i32_0 = arith.constant 0 : i32
    %c0_i32_1 = arith.constant 0 : i32
    return %c0_i32, %c0_i32_0 : i32, i32
  }
  func.func @transform_7(%arg0: i32) -> (i32, i32) {
    %c0_i32 = arith.constant 0 : i32
    %c0_i32_0 = arith.constant 0 : i32
    return %arg0, %c0_i32 : i32, i32
  }
}

</mosaic_0001>

<llo_original>
// kernel: geometric_step_down_forward.1
$region0: #{geometric_step_down_forward.1}
  #allocation0 [shape = 'u32[]', space=smem, size = 0x4, offset = 0x4, fixed_abs, tag = 'smem constant byte address 0x4 - core index']
  #allocation1 [shape = 'u32[72,128]{1,0:T(1,128)}', space=vmem, size = 0x9000, scoped, tag = 'internal scratch']
  %s0 = inlined_call_operand.hbm [shape: f32[8,128], index: 0, kind: input, shape index: {}]
  %s1 = inlined_call_operand.hbm [shape: bf16[128,128], index: 1, kind: input, shape index: {}]
  %s2 = inlined_call_operand.hbm [shape: f32[8,128], index: 2, kind: input, shape index: {}]
  %s3 = inlined_call_operand.hbm [shape: bf16[128,128], index: 3, kind: input, shape index: {}]
  %s4 = inlined_call_operand.hbm [shape: f32[8,128], index: 4, kind: input, shape index: {}]
  %s5 = inlined_call_operand.hbm [shape: bf16[128,128], index: 5, kind: input, shape index: {}]
  %s6 = inlined_call_operand.hbm [shape: f32[8,128], index: 6, kind: input, shape index: {}]
  %s7 = inlined_call_operand.hbm [shape: f32[8,128], index: 7, kind: output, shape index: {}]
  %s8 = sld [smem:[#allocation0]]
  $region66: #{geometric_step_down_forward.1} parent=0
    _
  %s10 = ssub.s32 1, %s8
  %s11 = scalar_select 0, %s10, %s8
  $region1: #{geometric_step_down_forward.1} parent=0
    #allocation2 [shape = 'u8[4096]{0}', space=vmem, size = 0x1000, scoped, tag = 'input window, operand 0, single buffered']
    #allocation3 [shape = 's32[1]{0}', space=sflag, size = 0x4, scoped, tag = 'scoped memory for geometric_step_down_forward.1']
    #allocation4 [shape = 's32[1]{0}', space=sflag, size = 0x4, scoped, tag = 'scoped memory for geometric_step_down_forward.1']
    #allocation5 [shape = 'u8[32768]{0}', space=vmem, size = 0x8000, scoped, tag = 'input window, operand 1, single buffered']
    #allocation6 [shape = 's32[1]{0}', space=sflag, size = 0x4, scoped, tag = 'scoped memory for geometric_step_down_forward.1']
    #allocation7 [shape = 'u8[4096]{0}', space=vmem, size = 0x1000, scoped, tag = 'input window, operand 2, single buffered']
    #allocation8 [shape = 'u8[32768]{0}', space=vmem, size = 0x8000, scoped, tag = 'input window, operand 3, single buffered']
    #allocation9 [shape = 's32[1]{0}', space=sflag, size = 0x4, scoped, tag = 'scoped memory for geometric_step_down_forward.1']
    #allocation10 [shape = 'u8[4096]{0}', space=vmem, size = 0x1000, scoped, tag = 'input window, operand 4, single buffered']
    #allocation11 [shape = 'u8[32768]{0}', space=vmem, size = 0x8000, scoped, tag = 'input window, operand 5, single buffered']
    #allocation12 [shape = 's32[1]{0}', space=sflag, size = 0x4, scoped, tag = 'scoped memory for geometric_step_down_forward.1']
    #allocation13 [shape = 'u8[4096]{0}', space=vmem, size = 0x1000, scoped, tag = 'input window, operand 6, single buffered']
    #allocation14 [shape = 'u8[4096]{0}', space=vmem, size = 0x1000, scoped, tag = 'output window, operand 0, single buffered']
    %12 = vsyncpa [#allocation3], 0
    %13 = vsyncpa [#allocation6], 0
    %14 = vsyncpa [#allocation9], 0
    %15 = vsyncpa [#allocation12], 0
    %16 = vsyncpa [#allocation4], 0
    // Predicated region
    $region2: #{geometric_step_down_forward.1} parent=1 // pred_check
      _
    $region3: #{geometric_step_down_forward.1} parent=1 // pred_check_branch
      %18 = sbr.rel (0) target = $region5
    $region4: #{geometric_step_down_forward.1} parent=1 // pred_region
      %20 = vsyncadd [#allocation3], 0
      %s22 = sshll.u32 %s0, 4
      %s23 = int_to_ptr.hbm [resolvable:$true] %s22
      %s24 = sshll.u32 [#allocation2], 4
      %s25 = int_to_ptr.vmem [resolvable:$true] %s24
      %27 = dma.hbm_to_vmem [thread:$0]  %s23, 128, %s25, [#allocation3]
    $region5: #{geometric_step_down_forward.1} parent=1 // pred_fallthru
      _
    // Predicated region
    $region6: #{geometric_step_down_forward.1} parent=1 // pred_check
      _
    $region7: #{geometric_step_down_forward.1} parent=1 // pred_check_branch
      %29 = sbr.rel (0) target = $region9
    $region8: #{geometric_step_down_forward.1} parent=1 // pred_region
      %31 = vsyncadd [#allocation6], 0
      %s32 = sshll.u32 %s1, 4
      %s33 = int_to_ptr.hbm [resolvable:$true] %s32
      %s34 = sshll.u32 [#allocation5], 4
      %s35 = int_to_ptr.vmem [resolvable:$true] %s34
      %40 = dma.hbm_to_vmem [thread:$0]  %s33, 1024, %s35, [#allocation6], 64, 64, 4
    $region9: #{geometric_step_down_forward.1} parent=1 // pred_fallthru
      _
    // Predicated region
    $region10: #{geometric_step_down_forward.1} parent=1 // pred_check
      _
    $region11: #{geometric_step_down_forward.1} parent=1 // pred_check_branch
      %42 = sbr.rel (0) target = $region13
    $region12: #{geometric_step_down_forward.1} parent=1 // pred_region
      %44 = vsyncadd [#allocation6], 0
      %s46 = sshll.u32 %s2, 4
      %s47 = int_to_ptr.hbm [resolvable:$true] %s46
      %s48 = sshll.u32 [#allocation7], 4
      %s49 = int_to_ptr.vmem [resolvable:$true] %s48
      %51 = dma.hbm_to_vmem [thread:$0]  %s47, 128, %s49, [#allocation6]
    $region13: #{geometric_step_down_forward.1} parent=1 // pred_fallthru
      _
    // Predicated region
    $region14: #{geometric_step_down_forward.1} parent=1 // pred_check
      _
    $region15: #{geometric_step_down_forward.1} parent=1 // pred_check_branch
      %53 = sbr.rel (0) target = $region17
    $region16: #{geometric_step_down_forward.1} parent=1 // pred_region
      %55 = vsyncadd [#allocation9], 0
      %s56 = sshll.u32 %s3, 4
      %s57 = int_to_ptr.hbm [resolvable:$true] %s56
      %s58 = sshll.u32 [#allocation8], 4
      %s59 = int_to_ptr.vmem [resolvable:$true] %s58
      %64 = dma.hbm_to_vmem [thread:$0]  %s57, 1024, %s59, [#allocation9], 64, 64, 4
    $region17: #{geometric_step_down_forward.1} parent=1 // pred_fallthru
      _
    // Predicated region
    $region18: #{geometric_step_down_forward.1} parent=1 // pred_check
      _
    $region19: #{geometric_step_down_forward.1} parent=1 // pred_check_branch
      %66 = sbr.rel (0) target = $region21
    $region20: #{geometric_step_down_forward.1} parent=1 // pred_region
      %68 = vsyncadd [#allocation9], 0
      %s70 = sshll.u32 %s4, 4
      %s71 = int_to_ptr.hbm [resolvable:$true] %s70
      %s72 = sshll.u32 [#allocation10], 4
      %s73 = int_to_ptr.vmem [resolvable:$true] %s72
      %75 = dma.hbm_to_vmem [thread:$0]  %s71, 128, %s73, [#allocation9]
    $region21: #{geometric_step_down_forward.1} parent=1 // pred_fallthru
      _
    // Predicated region
    $region22: #{geometric_step_down_forward.1} parent=1 // pred_check
      _
    $region23: #{geometric_step_down_forward.1} parent=1 // pred_check_branch
      %77 = sbr.rel (0) target = $region25
    $region24: #{geometric_step_down_forward.1} parent=1 // pred_region
      %79 = vsyncadd [#allocation12], 0
      %s80 = sshll.u32 %s5, 4
      %s81 = int_to_ptr.hbm [resolvable:$true] %s80
      %s82 = sshll.u32 [#allocation11], 4
      %s83 = int_to_ptr.vmem [resolvable:$true] %s82
      %88 = dma.hbm_to_vmem [thread:$0]  %s81, 1024, %s83, [#allocation12], 64, 64, 4
    $region25: #{geometric_step_down_forward.1} parent=1 // pred_fallthru
      _
    // Predicated region
    $region26: #{geometric_step_down_forward.1} parent=1 // pred_check
      _
    $region27: #{geometric_step_down_forward.1} parent=1 // pred_check_branch
      %90 = sbr.rel (0) target = $region29
    $region28: #{geometric_step_down_forward.1} parent=1 // pred_region
      %92 = vsyncadd [#allocation12], 0
      %s94 = sshll.u32 %s6, 4
      %s95 = int_to_ptr.hbm [resolvable:$true] %s94
      %s96 = sshll.u32 [#allocation13], 4
      %s97 = int_to_ptr.vmem [resolvable:$true] %s96
      %99 = dma.hbm_to_vmem [thread:$0]  %s95, 128, %s97, [#allocation12]
    $region29: #{geometric_step_down_forward.1} parent=1 // pred_fallthru
      _
    // Predicated region
    $region30: #{geometric_step_down_forward.1} parent=1 // pred_check
      _
    $region31: #{geometric_step_down_forward.1} parent=1 // pred_check_branch
      %101 = sbr.rel (0) target = $region33
    $region32: #{geometric_step_down_forward.1} parent=1 // pred_region
      %103 = dma.done [#allocation3], 128
    $region33: #{geometric_step_down_forward.1} parent=1 // pred_fallthru
      _
    // Predicated region
    $region34: #{geometric_step_down_forward.1} parent=1 // pred_check
      _
    $region35: #{geometric_step_down_forward.1} parent=1 // pred_check_branch
      %105 = sbr.rel (0) target = $region37
    $region36: #{geometric_step_down_forward.1} parent=1 // pred_region
      %107 = dma.done [#allocation6], 1024
    $region37: #{geometric_step_down_forward.1} parent=1 // pred_fallthru
      _
    // Predicated region
    $region38: #{geometric_step_down_forward.1} parent=1 // pred_check
      _
    $region39: #{geometric_step_down_forward.1} parent=1 // pred_check_branch
      %109 = sbr.rel (0) target = $region41
    $region40: #{geometric_step_down_forward.1} parent=1 // pred_region
      %111 = dma.done [#allocation6], 128
    $region41: #{geometric_step_down_forward.1} parent=1 // pred_fallthru
      _
    // Predicated region
    $region42: #{geometric_step_down_forward.1} parent=1 // pred_check
      _
    $region43: #{geometric_step_down_forward.1} parent=1 // pred_check_branch
      %113 = sbr.rel (0) target = $region45
    $region44: #{geometric_step_down_forward.1} parent=1 // pred_region
      %115 = dma.done [#allocation9], 1024
    $region45: #{geometric_step_down_forward.1} parent=1 // pred_fallthru
      _
    // Predicated region
    $region46: #{geometric_step_down_forward.1} parent=1 // pred_check
      _
    $region47: #{geometric_step_down_forward.1} parent=1 // pred_check_branch
      %117 = sbr.rel (0) target = $region49
    $region48: #{geometric_step_down_forward.1} parent=1 // pred_region
      %119 = dma.done [#allocation9], 128
    $region49: #{geometric_step_down_forward.1} parent=1 // pred_fallthru
      _
    // Predicated region
    $region50: #{geometric_step_down_forward.1} parent=1 // pred_check
      _
    $region51: #{geometric_step_down_forward.1} parent=1 // pred_check_branch
      %121 = sbr.rel (0) target = $region53
    $region52: #{geometric_step_down_forward.1} parent=1 // pred_region
      %123 = dma.done [#allocation12], 1024
    $region53: #{geometric_step_down_forward.1} parent=1 // pred_fallthru
      _
    // Predicated region
    $region54: #{geometric_step_down_forward.1} parent=1 // pred_check
      _
    $region55: #{geometric_step_down_forward.1} parent=1 // pred_check_branch
      %125 = sbr.rel (0) target = $region57
    $region56: #{geometric_step_down_forward.1} parent=1 // pred_region
      %127 = dma.done [#allocation12], 128
    $region57: #{geometric_step_down_forward.1} parent=1 // pred_fallthru
      _
    %v128 = vld [vmem:[#allocation2] sm:$0xff]
    %v129 = vld [vmem:[#allocation7] sm:$0xff]
    %v130 = vpack.c.bf16 %v128, %v128
    %v131 = vld [vmem:[#allocation5] sm:$0xf]
    %v132 = vld [vmem:[#allocation5 + $0x4] sm:$0xf]
    %v133 = vld [vmem:[#allocation5 + $0x8] sm:$0xf]
    %v134 = vld [vmem:[#allocation5 + $0xc] sm:$0xf]
    %v135 = vld [vmem:[#allocation5 + $0x10] sm:$0xf]
    %v136 = vld [vmem:[#allocation5 + $0x14] sm:$0xf]
    %v137 = vld [vmem:[#allocation5 + $0x18] sm:$0xf]
    %v138 = vld [vmem:[#allocation5 + $0x1c] sm:$0xf]
    %v139 = vld [vmem:[#allocation5 + $0x20] sm:$0xf]
    %v140 = vld [vmem:[#allocation5 + $0x24] sm:$0xf]
    %v141 = vld [vmem:[#allocation5 + $0x28] sm:$0xf]
    %v142 = vld [vmem:[#allocation5 + $0x2c] sm:$0xf]
    %v143 = vld [vmem:[#allocation5 + $0x30] sm:$0xf]
    %v144 = vld [vmem:[#allocation5 + $0x34] sm:$0xf]
    %v145 = vld [vmem:[#allocation5 + $0x38] sm:$0xf]
    %v146 = vld [vmem:[#allocation5 + $0x3c] sm:$0xf]
    %v147 = vperm.slane %v129, 0
    %v164 = vunpack.c.l.b16 %v131
    %v165 = vunpack.c.l.b16 %v132
    %v166 = vunpack.c.l.b16 %v133
    %v167 = vunpack.c.l.b16 %v134
    %v168 = vunpack.c.l.b16 %v135
    %v169 = vunpack.c.l.b16 %v136
    %v170 = vunpack.c.l.b16 %v137
    %v171 = vunpack.c.l.b16 %v138
    %v172 = vunpack.c.l.b16 %v139
    %v173 = vunpack.c.l.b16 %v140
    %v174 = vunpack.c.l.b16 %v141
    %v175 = vunpack.c.l.b16 %v142
    %v176 = vunpack.c.l.b16 %v143
    %v177 = vunpack.c.l.b16 %v144
    %v178 = vunpack.c.l.b16 %v145
    %v179 = vunpack.c.l.b16 %v146
    %v180 = vpack.c.b16 %v165, %v164
    %v181 = vpack.c.b16 %v167, %v166
    %v182 = vpack.c.b16 %v169, %v168
    %v183 = vpack.c.b16 %v171, %v170
    %v184 = vpack.c.b16 %v173, %v172
    %v185 = vpack.c.b16 %v175, %v174
    %v186 = vpack.c.b16 %v177, %v176
    %v187 = vpack.c.b16 %v179, %v178
    %196 = vmatpush.bf16.msra.mxu0 %v187
    %197 = vmatpush.bf16.msra.mxu0 %v186
    %198 = vmatpush.bf16.msra.mxu0 %v185
    %199 = vmatpush.bf16.msra.mxu0 %v184
    %200 = vmatpush.bf16.msra.mxu0 %v183
    %201 = vmatpush.bf16.msra.mxu0 %v182
    %202 = vmatpush.bf16.msra.mxu0 %v181
    %203 = vmatpush.bf16.msra.mxu0 %v180
    %204 = vmatmul.bf16.gmra.mxu0 %v130
    %v205 = vpop.f32.mrf.mxu0
    %v206 = vadd.f32 %v147, %v205
    %v207 = vpop.f32.mrf.mxu0
    %208 = vdwg.mxu0
    %v209 = vmax.f32 %v206, 0.0
    %v210 = vperm.slane %v129, 1
    %v211 = vmul.f32 %v209, %v210
    %v212 = vperm.slane %v129, 2
    %v213 = vadd.f32 %v211, %v212
    %v214 = vmax.f32 %v213, 0.0
    %v215 = vld [vmem:[#allocation10] sm:$0xff]
    %v216 = vpack.c.bf16 %v214, %v214
    %v217 = vld [vmem:[#allocation8] sm:$0xf]
    %v218 = vld [vmem:[#allocation8 + $0x4] sm:$0xf]
    %v219 = vld [vmem:[#allocation8 + $0x8] sm:$0xf]
    %v220 = vld [vmem:[#allocation8 + $0xc] sm:$0xf]
    %v221 = vld [vmem:[#allocation8 + $0x10] sm:$0xf]
    %v222 = vld [vmem:[#allocation8 + $0x14] sm:$0xf]
    %v223 = vld [vmem:[#allocation8 + $0x18] sm:$0xf]
    %v224 = vld [vmem:[#allocation8 + $0x1c] sm:$0xf]
    %v225 = vld [vmem:[#allocation8 + $0x20] sm:$0xf]
    %v226 = vld [vmem:[#allocation8 + $0x24] sm:$0xf]
    %v227 = vld [vmem:[#allocation8 + $0x28] sm:$0xf]
    %v228 = vld [vmem:[#allocation8 + $0x2c] sm:$0xf]
    %v229 = vld [vmem:[#allocation8 + $0x30] sm:$0xf]
    %v230 = vld [vmem:[#allocation8 + $0x34] sm:$0xf]
    %v231 = vld [vmem:[#allocation8 + $0x38] sm:$0xf]
    %v232 = vld [vmem:[#allocation8 + $0x3c] sm:$0xf]
    %v233 = vperm.slane %v215, 0
    %v250 = vunpack.c.l.b16 %v217
    %v251 = vunpack.c.l.b16 %v218
    %v252 = vunpack.c.l.b16 %v219
    %v253 = vunpack.c.l.b16 %v220
    %v254 = vunpack.c.l.b16 %v221
    %v255 = vunpack.c.l.b16 %v222
    %v256 = vunpack.c.l.b16 %v223
    %v257 = vunpack.c.l.b16 %v224
    %v258 = vunpack.c.l.b16 %v225
    %v259 = vunpack.c.l.b16 %v226
    %v260 = vunpack.c.l.b16 %v227
    %v261 = vunpack.c.l.b16 %v228
    %v262 = vunpack.c.l.b16 %v229
    %v263 = vunpack.c.l.b16 %v230
    %v264 = vunpack.c.l.b16 %v231
    %v265 = vunpack.c.l.b16 %v232
    %v266 = vpack.c.b16 %v251, %v250
    %v267 = vpack.c.b16 %v253, %v252
    %v268 = vpack.c.b16 %v255, %v254
    %v269 = vpack.c.b16 %v257, %v256
    %v270 = vpack.c.b16 %v259, %v258
    %v271 = vpack.c.b16 %v261, %v260
    %v272 = vpack.c.b16 %v263, %v262
    %v273 = vpack.c.b16 %v265, %v264
    %282 = vmatpush.bf16.msra.mxu0 %v273
    %283 = vmatpush.bf16.msra.mxu0 %v272
    %284 = vmatpush.bf16.msra.mxu0 %v271
    %285 = vmatpush.bf16.msra.mxu0 %v270
    %286 = vmatpush.bf16.msra.mxu0 %v269
    %287 = vmatpush.bf16.msra.mxu0 %v268
    %288 = vmatpush.bf16.msra.mxu0 %v267
    %289 = vmatpush.bf16.msra.mxu0 %v266
    %290 = vmatmul.bf16.gmra.mxu0 %v216
    %v291 = vpop.f32.mrf.mxu0
    %v292 = vadd.f32 %v233, %v291
    %v293 = vpop.f32.mrf.mxu0
    %294 = vdwg.mxu0
    %v295 = vmax.f32 %v292, 0.0
    %v296 = vperm.slane %v215, 1
    %v297 = vmul.f32 %v295, %v296
    %v298 = vperm.slane %v215, 2
    %v299 = vadd.f32 %v297, %v298
    %v300 = vmax.f32 %v299, 0.0
    %v301 = vld [vmem:[#allocation13] sm:$0xff]
    %v302 = vpack.c.bf16 %v300, %v300
    %v303 = vld [vmem:[#allocation11] sm:$0xf]
    %v304 = vld [vmem:[#allocation11 + $0x4] sm:$0xf]
    %v305 = vld [vmem:[#allocation11 + $0x8] sm:$0xf]
    %v306 = vld [vmem:[#allocation11 + $0xc] sm:$0xf]
    %v307 = vld [vmem:[#allocation11 + $0x10] sm:$0xf]
    %v308 = vld [vmem:[#allocation11 + $0x14] sm:$0xf]
    %v309 = vld [vmem:[#allocation11 + $0x18] sm:$0xf]
    %v310 = vld [vmem:[#allocation11 + $0x1c] sm:$0xf]
    %v311 = vld [vmem:[#allocation11 + $0x20] sm:$0xf]
    %v312 = vld [vmem:[#allocation11 + $0x24] sm:$0xf]
    %v313 = vld [vmem:[#allocation11 + $0x28] sm:$0xf]
    %v314 = vld [vmem:[#allocation11 + $0x2c] sm:$0xf]
    %v315 = vld [vmem:[#allocation11 + $0x30] sm:$0xf]
    %v316 = vld [vmem:[#allocation11 + $0x34] sm:$0xf]
    %v317 = vld [vmem:[#allocation11 + $0x38] sm:$0xf]
    %v318 = vld [vmem:[#allocation11 + $0x3c] sm:$0xf]
    %v319 = vperm.slane %v301, 0
    %v336 = vunpack.c.l.b16 %v303
    %v337 = vunpack.c.l.b16 %v304
    %v338 = vunpack.c.l.b16 %v305
    %v339 = vunpack.c.l.b16 %v306
    %v340 = vunpack.c.l.b16 %v307
    %v341 = vunpack.c.l.b16 %v308
    %v342 = vunpack.c.l.b16 %v309
    %v343 = vunpack.c.l.b16 %v310
    %v344 = vunpack.c.l.b16 %v311
    %v345 = vunpack.c.l.b16 %v312
    %v346 = vunpack.c.l.b16 %v313
    %v347 = vunpack.c.l.b16 %v314
    %v348 = vunpack.c.l.b16 %v315
    %v349 = vunpack.c.l.b16 %v316
    %v350 = vunpack.c.l.b16 %v317
    %v351 = vunpack.c.l.b16 %v318
    %v352 = vpack.c.b16 %v337, %v336
    %v353 = vpack.c.b16 %v339, %v338
    %v354 = vpack.c.b16 %v341, %v340
    %v355 = vpack.c.b16 %v343, %v342
    %v356 = vpack.c.b16 %v345, %v344
    %v357 = vpack.c.b16 %v347, %v346
    %v358 = vpack.c.b16 %v349, %v348
    %v359 = vpack.c.b16 %v351, %v350
    %368 = vmatpush.bf16.msra.mxu0 %v359
    %369 = vmatpush.bf16.msra.mxu0 %v358
    %370 = vmatpush.bf16.msra.mxu0 %v357
    %371 = vmatpush.bf16.msra.mxu0 %v356
    %372 = vmatpush.bf16.msra.mxu0 %v355
    %373 = vmatpush.bf16.msra.mxu0 %v354
    %374 = vmatpush.bf16.msra.mxu0 %v353
    %375 = vmatpush.bf16.msra.mxu0 %v352
    %376 = vmatmul.bf16.gmra.mxu0 %v302
    %v377 = vpop.f32.mrf.mxu0
    %v378 = vadd.f32 %v319, %v377
    %v379 = vpop.f32.mrf.mxu0
    %380 = vdwg.mxu0
    %v381 = vmax.f32 %v378, 0.0
    %v382 = vperm.slane %v301, 1
    %v383 = vmul.f32 %v381, %v382
    %v384 = vperm.slane %v301, 2
    %v385 = vadd.f32 %v383, %v384
    %v386 = vmax.f32 %v385, 0.0
    %387 = vst [vmem:[#allocation14] sm:$0xff] %v386
    // Predicated region
    $region58: #{geometric_step_down_forward.1} parent=1 // pred_check
      _
    $region59: #{geometric_step_down_forward.1} parent=1 // pred_check_branch
      %389 = sbr.rel (0) target = $region61
    $region60: #{geometric_step_down_forward.1} parent=1 // pred_region
      %391 = vsyncadd [#allocation4], 0
      %s393 = sshll.u32 [#allocation14], 4
      %s394 = int_to_ptr.vmem [resolvable:$true] %s393
      %s395 = sshll.u32 %s7, 4
      %s396 = int_to_ptr.hbm [resolvable:$true] %s395
      %398 = dma.vmem_to_hbm [thread:$0]  %s394, 128, %s396, [#allocation4]
    $region61: #{geometric_step_down_forward.1} parent=1 // pred_fallthru
      _
    // Predicated region
    $region62: #{geometric_step_down_forward.1} parent=1 // pred_check
      _
    $region63: #{geometric_step_down_forward.1} parent=1 // pred_check_branch
      %400 = sbr.rel (0) target = $region65
    $region64: #{geometric_step_down_forward.1} parent=1 // pred_region
      %402 = dma.done [#allocation4], 128
    $region65: #{geometric_step_down_forward.1} parent=1 // pred_fallthru
      _
    %403 = vsyncpa [#allocation3], 1
    %404 = vsyncpa [#allocation6], 1
    %405 = vsyncpa [#allocation9], 1
    %406 = vsyncpa [#allocation12], 1
    %407 = vsyncpa [#allocation4], 1

</llo_original>
